<compile_context>
chip_gen: v5e
topology: v5e:2x2
jax: 0.10.0
libtpu: 0.0.40
codegen_flags: <defaults>
</compile_context>

<pallas_src>
import math
from functools import partial

import jax
import jax.numpy as jnp
from jax import lax
from jax.experimental import pallas as pl
from jax.experimental.pallas import tpu as pltpu


def _round_up(x, m):
    return (x + m - 1) // m * m


def _pick_tile(total, target, granule):
    """Largest multiple-of-`granule` tile <= target that divides `total` (total % granule == 0)."""
    t = max(granule, min(total, (target // granule) * granule))
    while total % t:
        t -= granule
    return t


def _vmem_capacity_bytes():
    try:
        info = pltpu.get_tpu_info()
        cap = getattr(info, "vmem_capacity_bytes", None)
        if cap:
            return int(cap)
    except Exception:
        pass
    return 128 * 1024 * 1024


def _vmem_limit_bytes():
    # <= ~40 MiB on 64 MiB parts (v7x), 64 MiB on 128 MiB parts (v5e/v6e).
    cap = _vmem_capacity_bytes()
    return int(min(64 * 1024 * 1024, max(32 * 1024 * 1024, int(cap * 0.6))))


# -----------------------------------------------------------------------------
# Kernel 1: fused QKV projection + scaled-dot-product attention, query-tiled.
# -----------------------------------------------------------------------------
def _mha_core_kernel(q_ref, k_ref, v_ref,
                     wq_ref, bq_ref, wk_ref, bk_ref, wv_ref, bv_ref,
                     o_ref, k_scr, v_scr, *, s_valid, s_padded):
    qi = pl.program_id(1)

    # Project K and V once per batch (query-tile axis is the inner "arbitrary" axis); keep the
    # bf16 results resident in VMEM scratch for all query tiles of this batch.
    # TODO(synk): fused single-matmul QKV (concatenated weights) only applies when q is k is v;
    # the module signature takes distinct q/k/v so the projections stay separate.
    @pl.when(qi == 0)
    def _():
        kp = jnp.dot(k_ref[0], wk_ref[...], preferred_element_type=jnp.float32) + bk_ref[...]
        vp = jnp.dot(v_ref[0], wv_ref[...], preferred_element_type=jnp.float32) + bv_ref[...]
        k_scr[...] = kp.astype(k_scr.dtype)
        v_scr[...] = vp.astype(v_scr.dtype)

    # Q projection for this query tile; 1/sqrt(d_k) is pre-folded into wq/bq.
    qp = jnp.dot(q_ref[0], wq_ref[...], preferred_element_type=jnp.float32) + bq_ref[...]

    # scores = qp @ kp^T (contract last dims of both; bf16 MXU operands, f32 accumulation).
    s = lax.dot_general(qp.astype(k_scr.dtype), k_scr[...],
                        (((1,), (1,)), ((), ())),
                        preferred_element_type=jnp.float32)
    if s_padded > s_valid:  # mask padded key columns (padded keys carry a spurious bias)
        col = lax.broadcasted_iota(jnp.int32, s.shape, 1)
        s = jnp.where(col < s_valid, s, -1e30)
    # TODO(synk): optional `mask` argument (masked_fill with -1e9) not wired in; demo uses mask=None.

    m = jnp.max(s, axis=-1, keepdims=True)
    p = jnp.exp(s - m)
    denom = jnp.sum(p, axis=-1, keepdims=True)

    ctx = jnp.dot(p.astype(v_scr.dtype), v_scr[...], preferred_element_type=jnp.float32)
    ctx = ctx * pl.reciprocal(denom, approx=True)   # deferred softmax normalization (EUP recip)
    o_ref[0] = ctx.astype(o_ref.dtype)
    # TODO(synk): for very long S, stream K/V in tiles with an online-softmax (flash-style) loop
    # instead of keeping the full (Sp, Dp) kp/vp resident in scratch.


def _attention_core(qP, kP, vP, pp, *, s_valid, tq):
    """qP/kP/vP: (B, Sp, Dp) bf16, padded. Returns ctx (B, Sp, Dp) bf16."""
    B, Sp, Dp = qP.shape
    n_qt = Sp // tq
    cdt = qP.dtype

    cost = pl.CostEstimate(
        flops=B * (6 * Sp * Dp * Dp + 4 * Sp * Sp * Dp),
        transcendentals=B * Sp * Sp,
        bytes_accessed=2 * (4 * B * Sp * Dp + 3 * Dp * Dp) + 4 * 3 * Dp,
    )

    return pl.pallas_call(
        partial(_mha_core_kernel, s_valid=s_valid, s_padded=Sp),
        out_shape=jax.ShapeDtypeStruct((B, Sp, Dp), cdt),
        grid_spec=pltpu.PrefetchScalarGridSpec(
            num_scalar_prefetch=0,
            grid=(B, n_qt),
            in_specs=[
                pl.BlockSpec((1, tq, Dp), lambda b, qi: (b, qi, 0)),   # q tile
                pl.BlockSpec((1, Sp, Dp), lambda b, qi: (b, 0, 0)),    # k (resident per batch)
                pl.BlockSpec((1, Sp, Dp), lambda b, qi: (b, 0, 0)),    # v (resident per batch)
                # Constant index -> weights stay resident across the whole grid.
                # TODO(synk): if MLIR shows these still double-buffered, add pipeline_mode=pl.Buffered(1).
                pl.BlockSpec((Dp, Dp), lambda b, qi: (0, 0)),          # Wq (scale folded in)
                pl.BlockSpec((1, Dp), lambda b, qi: (0, 0)),           # bq (f32)
                pl.BlockSpec((Dp, Dp), lambda b, qi: (0, 0)),          # Wk
                pl.BlockSpec((1, Dp), lambda b, qi: (0, 0)),           # bk
                pl.BlockSpec((Dp, Dp), lambda b, qi: (0, 0)),          # Wv
                pl.BlockSpec((1, Dp), lambda b, qi: (0, 0)),           # bv
            ],
            out_specs=pl.BlockSpec((1, tq, Dp), lambda b, qi: (b, qi, 0)),
            scratch_shapes=[pltpu.VMEM((Sp, Dp), cdt),    # projected K (bf16)
                            pltpu.VMEM((Sp, Dp), cdt)],   # projected V (bf16)
        ),
        compiler_params=pltpu.CompilerParams(
            dimension_semantics=("parallel", "arbitrary"),
            vmem_limit_bytes=_vmem_limit_bytes(),
        ),
        cost_estimate=cost,
    )(qP, kP, vP, pp["wq"], pp["bq"], pp["wk"], pp["bk"], pp["wv"], pp["bv"])


# -----------------------------------------------------------------------------
# Kernel 2: tiled linear  out = x @ W + b.
# -----------------------------------------------------------------------------
def _linear_acc_kernel(x_ref, w_ref, b_ref, o_ref, acc_ref):
    kk = pl.program_id(2)

    @pl.when(kk == 0)
    def _():
        acc_ref[...] = jnp.zeros_like(acc_ref)

    acc_ref[...] += jnp.dot(x_ref[...], w_ref[...], preferred_element_type=jnp.float32)

    @pl.when(kk == pl.num_programs(2) - 1)
    def _():
        o_ref[...] = (acc_ref[...] + b_ref[...]).astype(o_ref.dtype)


def _linear_kernel(x_ref, w_ref, b_ref, o_ref):
    o_ref[...] = (jnp.dot(x_ref[...], w_ref[...], preferred_element_type=jnp.float32)
                  + b_ref[...]).astype(o_ref.dtype)


def _linear(x2d, w_pad, b_pad, *, n_out_valid, out_dtype):
    """x2d: (M, Din); w_pad: (Kp, Np) pre-padded bf16 weight (in,out layout); b_pad: (1, Np) f32."""
    M, Din = x2d.shape
    Kp, Np = w_pad.shape

    cap = _vmem_capacity_bytes()
    tile_target = 1024 if cap > 64 * 1024 * 1024 else 512   # bigger tiles on 128 MiB parts

    tm = min(tile_target, _round_up(M, 8))
    Mp = _round_up(M, tm)
    tk = _pick_tile(Kp, tile_target, 128)
    tn = _pick_tile(Np, tile_target, 128)

    xp = jnp.pad(x2d, ((0, Mp - M), (0, Kp - Din))).astype(w_pad.dtype)

    cost = pl.CostEstimate(
        flops=2 * Mp * Kp * Np,
        transcendentals=0,
        bytes_accessed=2 * (Mp * Kp + Kp * Np) + 4 * (Np + Mp * Np),
    )
    cparams = pltpu.CompilerParams(
        dimension_semantics=("parallel", "parallel") + (("arbitrary",) if Kp != tk else ()),
        vmem_limit_bytes=_vmem_limit_bytes(),
    )

    if Kp == tk:
        # K fully resident: no reduction grid axis, no f32 accumulator scratch.
        out = pl.pallas_call(
            _linear_kernel,
            out_shape=jax.ShapeDtypeStruct((Mp, Np), out_dtype),
            grid_spec=pltpu.PrefetchScalarGridSpec(
                num_scalar_prefetch=0,
                grid=(Mp // tm, Np // tn),
                in_specs=[
                    pl.BlockSpec((tm, Kp), lambda i, j: (i, 0)),
                    pl.BlockSpec((Kp, tn), lambda i, j: (0, j)),
                    pl.BlockSpec((1, tn), lambda i, j: (0, j)),
                ],
                out_specs=pl.BlockSpec((tm, tn), lambda i, j: (i, j)),
            ),
            compiler_params=cparams,
            cost_estimate=cost,
        )(xp, w_pad, b_pad)
    else:
        out = pl.pallas_call(
            _linear_acc_kernel,
            out_shape=jax.ShapeDtypeStruct((Mp, Np), out_dtype),
            grid_spec=pltpu.PrefetchScalarGridSpec(
                num_scalar_prefetch=0,
                grid=(Mp // tm, Np // tn, Kp // tk),
                in_specs=[
                    pl.BlockSpec((tm, tk), lambda i, j, kk: (i, kk)),
                    pl.BlockSpec((tk, tn), lambda i, j, kk: (kk, j)),
                    pl.BlockSpec((1, tn), lambda i, j, kk: (0, j)),
                ],
                out_specs=pl.BlockSpec((tm, tn), lambda i, j, kk: (i, j)),
                scratch_shapes=[pltpu.VMEM((tm, tn), jnp.float32)],
            ),
            compiler_params=cparams,
            cost_estimate=cost,
        )(xp, w_pad, b_pad)

    return out[:M, :n_out_valid]


# -----------------------------------------------------------------------------
# Parameter prep (done ONCE) + forward wrapper.
# -----------------------------------------------------------------------------
def prepare_params(params, num_heads, compute_dtype=jnp.bfloat16):
    """Pad weights once to lane-aligned Dp, fold 1/sqrt(d_k) into the Q projection, cast MXU
    operands (weights) to bf16; biases stay f32 (added onto the f32 MXU accumulator)."""
    D = params["wq"].shape[0]
    assert D % num_heads == 0
    d_k = D // num_heads
    scale = 1.0 / math.sqrt(d_k)
    Dp = _round_up(max(D, 128), 128)

    pad_w = lambda w: jnp.pad(w, ((0, Dp - D), (0, Dp - D)))
    pad_b = lambda b: jnp.pad(b, (0, Dp - D)).reshape(1, Dp)

    return dict(
        wq=(pad_w(params["wq"]) * scale).astype(compute_dtype),
        bq=(pad_b(params["bq"]) * scale).astype(jnp.float32),
        wk=pad_w(params["wk"]).astype(compute_dtype),
        bk=pad_b(params["bk"]).astype(jnp.float32),
        wv=pad_w(params["wv"]).astype(compute_dtype),
        bv=pad_b(params["bv"]).astype(jnp.float32),
        wo=pad_w(params["wo"]).astype(compute_dtype),
        bo=pad_b(params["bo"]).astype(jnp.float32),
    )


def multi_head_attention(q, k, v, prepared, num_heads, mask=None, *, tq_target=256):
    """q, k, v: (B, S, D) float arrays. `prepared` comes from prepare_params()."""
    assert mask is None, "TODO(synk): mask path not implemented"
    B, S, D = q.shape
    assert D % num_heads == 0
    d_k = D // num_heads
    Dp = prepared["wq"].shape[0]
    cdt = prepared["wq"].dtype

    # Query tile: multiple of 8 sublanes; pad S up to a whole number of tiles (padded key
    # columns are masked to -inf in-kernel; padded query rows are inert and stripped below).
    tq = max(8, (min(tq_target, _round_up(S, 8)) // 8) * 8)
    Sp = _round_up(S, tq)

    pad_seq = lambda x: jnp.pad(x, ((0, 0), (0, Sp - S), (0, Dp - D))).astype(cdt)
    ctx = _attention_core(pad_seq(q), pad_seq(k), pad_seq(v), prepared, s_valid=S, tq=tq)

    # Strip padding, then replicate the PyTorch module's late head shuffle:
    # view(B,S,H,d_k) -> transpose(1,2) -> contiguous().view(B,S,D). Pure layout plumbing.
    # TODO(synk): for production shapes with d_k % 128 == 0 this permutation can be folded into
    # kernel 1's output layout ((B,H,S,d_k) lane-dense blocks) to remove the HBM round trip;
    # at d_k < 128 (this demo: d_k=8) that would force masked partial stores, so it stays here.
    ctx = ctx[:, :S, :D]
    ctx = ctx.reshape(B, S, num_heads, d_k).transpose(0, 2, 1, 3).reshape(B, S, D)

    out = _linear(ctx.reshape(B * S, D), prepared["wo"], prepared["bo"],
                  n_out_valid=D, out_dtype=q.dtype)
    return out.reshape(B, S, D)


def init_params(key, input_dim, dtype=jnp.float32):
    """nn.Linear-style init; weights stored in (in, out) layout."""
    keys = jax.random.split(key, 8)
    lim = 1.0 / math.sqrt(input_dim)
    u = lambda kk, shape: jax.random.uniform(kk, shape, dtype, -lim, lim)
    return dict(
        wq=u(keys[0], (input_dim, input_dim)), bq=u(keys[1], (input_dim,)),
        wk=u(keys[2], (input_dim, input_dim)), bk=u(keys[3], (input_dim,)),
        wv=u(keys[4], (input_dim, input_dim)), bv=u(keys[5], (input_dim,)),
        wo=u(keys[6], (input_dim, input_dim)), bo=u(keys[7], (input_dim,)),
    )


def reference_mha(q, k, v, params, num_heads):
    """Pure-JAX replica of the PyTorch forward (mask=None), full f32 precision."""
    B, S, D = q.shape
    d_k = D // num_heads
    hp = jax.lax.Precision.HIGHEST
    qp = jnp.einsum("bsd,de->bse", q, params["wq"], precision=hp) + params["bq"]
    kp = jnp.einsum("bsd,de->bse", k, params["wk"], precision=hp) + params["bk"]
    vp = jnp.einsum("bsd,de->bse", v, params["wv"], precision=hp) + params["bv"]
    s = jnp.einsum("bqd,bkd->bqk", qp, kp, precision=hp) / math.sqrt(d_k)
    a = jax.nn.softmax(s, axis=-1)
    o = jnp.einsum("bqk,bkd->bqd", a, vp, precision=hp)
    o = o.reshape(B, S, num_heads, d_k).transpose(0, 2, 1, 3).reshape(B, S, D)
    return jnp.einsum("bsd,de->bse", o, params["wo"], precision=hp) + params["bo"]


if __name__ == "__main__":
    key = jax.random.PRNGKey(0)
    kq, kk_, kv_, kpar = jax.random.split(key, 4)

    batch, seq, input_dim, num_heads = 2, 8, 32, 4
    q = jax.random.normal(kq, (batch, seq, input_dim), jnp.float32)
    k = jax.random.normal(kk_, (batch, seq, input_dim), jnp.float32)
    v = jax.random.normal(kv_, (batch, seq, input_dim), jnp.float32)
    params = init_params(kpar, input_dim)

    prepared = prepare_params(params, num_heads)          # padded / scaled / bf16 weights, once
    y = multi_head_attention(q, k, v, prepared, num_heads)
    jax.block_until_ready(y)

    ref = reference_mha(q, k, v, params, num_heads)
    assert y.shape == ref.shape
    err = float(jnp.max(jnp.abs(y.astype(jnp.float32) - ref)))
    # bf16 MXU operands + approx reciprocal -> looser tolerance vs the f32 HIGHEST reference.
    assert jnp.allclose(y.astype(jnp.float32), ref, atol=5e-2, rtol=5e-2), \
        f"mismatch vs reference, max|err|={err}"

    print("KERNEL_OK")
</pallas_src>

<mosaic_0001>
module attributes {stable_mosaic.version = 11 : i64} {
  func.func @_mha_core_kernel(%arg0: i32, %arg1: i32, %arg2: memref<1x8x128xbf16, #tpu.memory_space<vmem>>, %arg3: memref<1x8x128xbf16, #tpu.memory_space<vmem>>, %arg4: memref<1x8x128xbf16, #tpu.memory_space<vmem>>, %arg5: memref<128x128xbf16, #tpu.memory_space<vmem>>, %arg6: memref<1x128xf32, #tpu.memory_space<vmem>>, %arg7: memref<128x128xbf16, #tpu.memory_space<vmem>>, %arg8: memref<1x128xf32, #tpu.memory_space<vmem>>, %arg9: memref<128x128xbf16, #tpu.memory_space<vmem>>, %arg10: memref<1x128xf32, #tpu.memory_space<vmem>>, %arg11: memref<1x8x128xbf16, #tpu.memory_space<vmem>>, %arg12: memref<8x128xbf16, #tpu.memory_space<vmem>>, %arg13: memref<8x128xbf16, #tpu.memory_space<vmem>>) attributes {dimension_semantics = [#tpu.dimension_semantics<parallel>, #tpu.dimension_semantics<arbitrary>], iteration_bounds = array<i64: 2, 1>, scalar_prefetch = 0 : i64, scratch_operands = 2 : i64, tpu.core_type = #tpu.core_type<tc>, window_params = [{transform_indices = @transform_0, window_bounds = array<i64: 1, 8, 128>}, {transform_indices = @transform_1, window_bounds = array<i64: 1, 8, 128>}, {transform_indices = @transform_2, window_bounds = array<i64: 1, 8, 128>}, {pipeline_mode = #tpu.pipeline_mode<synchronous>, transform_indices = @transform_3, window_bounds = array<i64: 128, 128>}, {pipeline_mode = #tpu.pipeline_mode<synchronous>, transform_indices = @transform_4, window_bounds = array<i64: 1, 128>}, {pipeline_mode = #tpu.pipeline_mode<synchronous>, transform_indices = @transform_5, window_bounds = array<i64: 128, 128>}, {pipeline_mode = #tpu.pipeline_mode<synchronous>, transform_indices = @transform_6, window_bounds = array<i64: 1, 128>}, {pipeline_mode = #tpu.pipeline_mode<synchronous>, transform_indices = @transform_7, window_bounds = array<i64: 128, 128>}, {pipeline_mode = #tpu.pipeline_mode<synchronous>, transform_indices = @transform_8, window_bounds = array<i64: 1, 128>}, {transform_indices = @transform_9, window_bounds = array<i64: 1, 8, 128>}]} {
    %c0_i32 = arith.constant 0 : i32
    %0 = arith.cmpi eq, %arg1, %c0_i32 : i32
    %1 = arith.extui %0 : i1 to i32
    %c0_i32_0 = arith.constant 0 : i32
    %2 = arith.cmpi ne, %1, %c0_i32_0 : i32
    scf.if %2 {
      %c0_18 = arith.constant 0 : index
      %c0_19 = arith.constant 0 : index
      %c0_20 = arith.constant 0 : index
      %30 = vector.load %arg3[%c0_18, %c0_19, %c0_20] : memref<1x8x128xbf16, #tpu.memory_space<vmem>>, vector<1x8x128xbf16>
      %31 = vector.shape_cast %30 : vector<1x8x128xbf16> to vector<8x128xbf16>
      %c0_21 = arith.constant 0 : index
      %c0_22 = arith.constant 0 : index
      %32 = vector.load %arg7[%c0_21, %c0_22] : memref<128x128xbf16, #tpu.memory_space<vmem>>, vector<128x128xbf16>
      %cst_23 = arith.constant dense<0.000000e+00> : vector<8x128xf32>
      %33 = tpu.matmul %31, %32, %cst_23 {dimension_numbers = #tpu.dot_dimension_numbers<[1], [0], [0], [1], [0, 0, 1, 1], [], []>} : vector<8x128xbf16>, vector<128x128xbf16>, vector<8x128xf32> -> vector<8x128xf32>
      %c0_24 = arith.constant 0 : index
      %c0_25 = arith.constant 0 : index
      %34 = vector.load %arg8[%c0_24, %c0_25] : memref<1x128xf32, #tpu.memory_space<vmem>>, vector<1x128xf32>
      %35 = vector.broadcast %34 : vector<1x128xf32> to vector<8x128xf32>
      %36 = arith.addf %33, %35 : vector<8x128xf32>
      %c0_26 = arith.constant 0 : index
      %c0_27 = arith.constant 0 : index
      %c0_28 = arith.constant 0 : index
      %37 = vector.load %arg4[%c0_26, %c0_27, %c0_28] : memref<1x8x128xbf16, #tpu.memory_space<vmem>>, vector<1x8x128xbf16>
      %38 = vector.shape_cast %37 : vector<1x8x128xbf16> to vector<8x128xbf16>
      %c0_29 = arith.constant 0 : index
      %c0_30 = arith.constant 0 : index
      %39 = vector.load %arg9[%c0_29, %c0_30] : memref<128x128xbf16, #tpu.memory_space<vmem>>, vector<128x128xbf16>
      %cst_31 = arith.constant dense<0.000000e+00> : vector<8x128xf32>
      %40 = tpu.matmul %38, %39, %cst_31 {dimension_numbers = #tpu.dot_dimension_numbers<[1], [0], [0], [1], [0, 0, 1, 1], [], []>} : vector<8x128xbf16>, vector<128x128xbf16>, vector<8x128xf32> -> vector<8x128xf32>
      %c0_32 = arith.constant 0 : index
      %c0_33 = arith.constant 0 : index
      %41 = vector.load %arg10[%c0_32, %c0_33] : memref<1x128xf32, #tpu.memory_space<vmem>>, vector<1x128xf32>
      %42 = vector.broadcast %41 : vector<1x128xf32> to vector<8x128xf32>
      %43 = arith.addf %40, %42 : vector<8x128xf32>
      %44 = arith.truncf %36 : vector<8x128xf32> to vector<8x128xbf16>
      %c0_34 = arith.constant 0 : index
      %c0_35 = arith.constant 0 : index
      %45 = vector.load %arg12[%c0_34, %c0_35] : memref<8x128xbf16, #tpu.memory_space<vmem>>, vector<8x128xbf16>
      tpu.vector_store %arg12[%c0_34, %c0_35], %44 {strides = array<i32>} : memref<8x128xbf16, #tpu.memory_space<vmem>>, vector<8x128xbf16>,
      %46 = arith.truncf %43 : vector<8x128xf32> to vector<8x128xbf16>
      %c0_36 = arith.constant 0 : index
      %c0_37 = arith.constant 0 : index
      %47 = vector.load %arg13[%c0_36, %c0_37] : memref<8x128xbf16, #tpu.memory_space<vmem>>, vector<8x128xbf16>
      tpu.vector_store %arg13[%c0_36, %c0_37], %46 {strides = array<i32>} : memref<8x128xbf16, #tpu.memory_space<vmem>>, vector<8x128xbf16>,
    } else {
    }
    %c0 = arith.constant 0 : index
    %c0_1 = arith.constant 0 : index
    %c0_2 = arith.constant 0 : index
    %3 = vector.load %arg2[%c0, %c0_1, %c0_2] : memref<1x8x128xbf16, #tpu.memory_space<vmem>>, vector<1x8x128xbf16>
    %4 = vector.shape_cast %3 : vector<1x8x128xbf16> to vector<8x128xbf16>
    %c0_3 = arith.constant 0 : index
    %c0_4 = arith.constant 0 : index
    %5 = vector.load %arg5[%c0_3, %c0_4] : memref<128x128xbf16, #tpu.memory_space<vmem>>, vector<128x128xbf16>
    %cst = arith.constant dense<0.000000e+00> : vector<8x128xf32>
    %6 = tpu.matmul %4, %5, %cst {dimension_numbers = #tpu.dot_dimension_numbers<[1], [0], [0], [1], [0, 0, 1, 1], [], []>} : vector<8x128xbf16>, vector<128x128xbf16>, vector<8x128xf32> -> vector<8x128xf32>
    %c0_5 = arith.constant 0 : index
    %c0_6 = arith.constant 0 : index
    %7 = vector.load %arg6[%c0_5, %c0_6] : memref<1x128xf32, #tpu.memory_space<vmem>>, vector<1x128xf32>
    %8 = vector.broadcast %7 : vector<1x128xf32> to vector<8x128xf32>
    %9 = arith.addf %6, %8 : vector<8x128xf32>
    %10 = arith.truncf %9 : vector<8x128xf32> to vector<8x128xbf16>
    %c0_7 = arith.constant 0 : index
    %c0_8 = arith.constant 0 : index
    %11 = vector.load %arg12[%c0_7, %c0_8] : memref<8x128xbf16, #tpu.memory_space<vmem>>, vector<8x128xbf16>
    %cst_9 = arith.constant dense<0.000000e+00> : vector<8x8xf32>
    %12 = tpu.matmul %10, %11, %cst_9 {dimension_numbers = #tpu.dot_dimension_numbers<[1], [1], [0], [0], [0, 0, 1, 0], [], []>} : vector<8x128xbf16>, vector<8x128xbf16>, vector<8x8xf32> -> vector<8x8xf32>
    %cst_10 = arith.constant dense<0xFF800000> : vector<8xf32>
    %13 = vector.multi_reduction <maximumf>, %12, %cst_10 [1] : vector<8x8xf32> to vector<8xf32>
    %14 = vector.shape_cast %13 : vector<8xf32> to vector<8x1xf32>
    %15 = vector.broadcast %14 : vector<8x1xf32> to vector<8x8xf32>
    %16 = arith.subf %12, %15 : vector<8x8xf32>
    %17 = math.exp %16 : vector<8x8xf32>
    %cst_11 = arith.constant dense<0.000000e+00> : vector<8xf32>
    %18 = vector.multi_reduction <add>, %17, %cst_11 [1] : vector<8x8xf32> to vector<8xf32>
    %19 = vector.shape_cast %18 : vector<8xf32> to vector<8x1xf32>
    %20 = arith.truncf %17 : vector<8x8xf32> to vector<8x8xbf16>
    %c0_12 = arith.constant 0 : index
    %c0_13 = arith.constant 0 : index
    %21 = vector.load %arg13[%c0_12, %c0_13] : memref<8x128xbf16, #tpu.memory_space<vmem>>, vector<8x128xbf16>
    %cst_14 = arith.constant dense<0.000000e+00> : vector<8x128xf32>
    %22 = tpu.matmul %20, %21, %cst_14 {dimension_numbers = #tpu.dot_dimension_numbers<[1], [0], [0], [1], [0, 0, 1, 1], [], []>} : vector<8x8xbf16>, vector<8x128xbf16>, vector<8x128xf32> -> vector<8x128xf32>
    %23 = tpu.reciprocal %19 {approx = true} : vector<8x1xf32> -> vector<8x1xf32>
    %24 = vector.broadcast %23 : vector<8x1xf32> to vector<8x128xf32>
    %25 = arith.mulf %22, %24 : vector<8x128xf32>
    %26 = arith.truncf %25 : vector<8x128xf32> to vector<8x128xbf16>
    %c0_15 = arith.constant 0 : index
    %c0_16 = arith.constant 0 : index
    %c0_17 = arith.constant 0 : index
    %27 = vector.load %arg11[%c0_15, %c0_16, %c0_17] : memref<1x8x128xbf16, #tpu.memory_space<vmem>>, vector<1x8x128xbf16>
    %28 = vector.shape_cast %27 : vector<1x8x128xbf16> to vector<8x128xbf16>
    %29 = vector.shape_cast %26 : vector<8x128xbf16> to vector<1x8x128xbf16>
    tpu.vector_store %arg11[%c0_15, %c0_16, %c0_17], %29 {strides = array<i32>} : memref<1x8x128xbf16, #tpu.memory_space<vmem>>, vector<1x8x128xbf16>,
    return
  }
  func.func @transform_0(%arg0: i32, %arg1: i32) -> (i32, i32, i32) {
    %c0_i32 = arith.constant 0 : i32
    %c0_i32_0 = arith.constant 0 : i32
    return %arg0, %arg1, %c0_i32 : i32, i32, i32
  }
  func.func @transform_1(%arg0: i32, %arg1: i32) -> (i32, i32, i32) {
    %c0_i32 = arith.constant 0 : i32
    %c0_i32_0 = arith.constant 0 : i32
    %c0_i32_1 = arith.constant 0 : i32
    return %arg0, %c0_i32, %c0_i32_0 : i32, i32, i32
  }
  func.func @transform_2(%arg0: i32, %arg1: i32) -> (i32, i32, i32) {
    %c0_i32 = arith.constant 0 : i32
    %c0_i32_0 = arith.constant 0 : i32
    %c0_i32_1 = arith.constant 0 : i32
    return %arg0, %c0_i32, %c0_i32_0 : i32, i32, i32
  }
  func.func @transform_3(%arg0: i32, %arg1: i32) -> (i32, i32) {
    %c0_i32 = arith.constant 0 : i32
    %c0_i32_0 = arith.constant 0 : i32
    %c0_i32_1 = arith.constant 0 : i32
    return %c0_i32, %c0_i32_0 : i32, i32
  }
  func.func @transform_4(%arg0: i32, %arg1: i32) -> (i32, i32) {
    %c0_i32 = arith.constant 0 : i32
    %c0_i32_0 = arith.constant 0 : i32
    %c0_i32_1 = arith.constant 0 : i32
    return %c0_i32, %c0_i32_0 : i32, i32
  }
  func.func @transform_5(%arg0: i32, %arg1: i32) -> (i32, i32) {
    %c0_i32 = arith.constant 0 : i32
    %c0_i32_0 = arith.constant 0 : i32
    %c0_i32_1 = arith.constant 0 : i32
    return %c0_i32, %c0_i32_0 : i32, i32
  }
  func.func @transform_6(%arg0: i32, %arg1: i32) -> (i32, i32) {
    %c0_i32 = arith.constant 0 : i32
    %c0_i32_0 = arith.constant 0 : i32
    %c0_i32_1 = arith.constant 0 : i32
    return %c0_i32, %c0_i32_0 : i32, i32
  }
  func.func @transform_7(%arg0: i32, %arg1: i32) -> (i32, i32) {
    %c0_i32 = arith.constant 0 : i32
    %c0_i32_0 = arith.constant 0 : i32
    %c0_i32_1 = arith.constant 0 : i32
    return %c0_i32, %c0_i32_0 : i32, i32
  }
  func.func @transform_8(%arg0: i32, %arg1: i32) -> (i32, i32) {
    %c0_i32 = arith.constant 0 : i32
    %c0_i32_0 = arith.constant 0 : i32
    %c0_i32_1 = arith.constant 0 : i32
    return %c0_i32, %c0_i32_0 : i32, i32
  }
  func.func @transform_9(%arg0: i32, %arg1: i32) -> (i32, i32, i32) {
    %c0_i32 = arith.constant 0 : i32
    %c0_i32_0 = arith.constant 0 : i32
    return %arg0, %arg1, %c0_i32 : i32, i32, i32
  }
}

</mosaic_0001>

<llo_original>
// kernel: tpu_custom_call.1
$region0: #{tpu_custom_call.1}
  #allocation0 [shape = 'u32[]', space=smem, size = 0x4, offset = 0x4, fixed_abs, tag = 'smem constant byte address 0x4 - core index']
  #allocation1 [shape = 'u32[72,128]{1,0:T(1,128)}', space=vmem, size = 0x9000, scoped, tag = 'internal scratch']
  #allocation2 [shape = 'bf16[8,128]{1,0:T(8,128)(2,1)}', space=vmem, size = 0x800, scoped, tag = 'scratch operand']
  #allocation3 [shape = 'bf16[8,128]{1,0:T(8,128)(2,1)}', space=vmem, size = 0x800, scoped, tag = 'scratch operand']
  %s0 = inlined_call_operand.hbm [shape: bf16[2,8,128], index: 0, kind: input, shape index: {}]
  %s1 = inlined_call_operand.hbm [shape: bf16[2,8,128], index: 1, kind: input, shape index: {}]
  %s2 = inlined_call_operand.hbm [shape: bf16[2,8,128], index: 2, kind: input, shape index: {}]
  %s3 = inlined_call_operand.hbm [shape: bf16[128,128], index: 3, kind: input, shape index: {}]
  %s4 = inlined_call_operand.vmem [shape: f32[1,128], index: 4, kind: input, shape index: {}]
  %s5 = inlined_call_operand.hbm [shape: bf16[128,128], index: 5, kind: input, shape index: {}]
  %s6 = inlined_call_operand.vmem [shape: f32[1,128], index: 6, kind: input, shape index: {}]
  %s7 = inlined_call_operand.hbm [shape: bf16[128,128], index: 7, kind: input, shape index: {}]
  %s8 = inlined_call_operand.vmem [shape: f32[1,128], index: 8, kind: input, shape index: {}]
  %s9 = inlined_call_operand.hbm [shape: bf16[2,8,128], index: 9, kind: output, shape index: {}]
  %s10 = sld [smem:[#allocation0]]
  $region97: #{tpu_custom_call.1} parent=0
    _
  %s12 = ssub.s32 1, %s10
  %s13 = scalar_select 0, %s12, %s10
  $region1: #{tpu_custom_call.1} parent=0
    #allocation4 [shape = 'u8[4096]{0}', space=vmem, size = 0x1000, scoped, tag = 'input window, operand 0']
    #allocation5 [shape = 's32[2]{0}', space=sflag, size = 0x8, scoped, tag = 'scoped memory for tpu_custom_call.1']
    #allocation6 [shape = 's32[2]{0}', space=sflag, size = 0x8, scoped, tag = 'scoped memory for tpu_custom_call.1']
    #allocation7 [shape = 'u8[4096]{0}', space=vmem, size = 0x1000, scoped, tag = 'input window, operand 1']
    #allocation8 [shape = 's32[2]{0}', space=sflag, size = 0x8, scoped, tag = 'scoped memory for tpu_custom_call.1']
    #allocation9 [shape = 'u8[4096]{0}', space=vmem, size = 0x1000, scoped, tag = 'input window, operand 2']
    #allocation10 [shape = 'u8[32768]{0}', space=vmem, size = 0x8000, scoped, tag = 'input window, operand 3, single buffered']
    #allocation11 [shape = 's32[1]{0}', space=sflag, size = 0x4, scoped, tag = 'scoped memory for tpu_custom_call.1']
    #allocation12 [shape = 'u8[32768]{0}', space=vmem, size = 0x8000, scoped, tag = 'input window, operand 5, single buffered']
    #allocation13 [shape = 'u8[32768]{0}', space=vmem, size = 0x8000, scoped, tag = 'input window, operand 7, single buffered']
    #allocation14 [shape = 's32[1]{0}', space=sflag, size = 0x4, scoped, tag = 'scoped memory for tpu_custom_call.1']
    #allocation15 [shape = 'u8[4096]{0}', space=vmem, size = 0x1000, scoped, tag = 'output window, operand 0']
    %14 = vsyncpa [#allocation5], 0
    %s15 = scalar_lea.sflag [#allocation5], 1
    %16 = vsyncpa %s15, 0
    %17 = vsyncpa [#allocation8], 0
    %s18 = scalar_lea.sflag [#allocation8], 1
    %19 = vsyncpa %s18, 0
    %20 = vsyncpa [#allocation11], 0
    %21 = vsyncpa [#allocation14], 0
    %22 = vsyncpa [#allocation6], 0
    %s23 = scalar_lea.sflag [#allocation6], 1
    %24 = vsyncpa %s23, 0
    loop: start=0, step=1, limit=4
    $region2: #{tpu_custom_call.1} parent=1 // loop_pre_header
      _
    $region3: #{tpu_custom_call.1} parent=1 // loop_header
      %s26 = sphi 0, %s30
      %p27 = scmp.ge.s32.totalorder %s26, 4
      %s33 = sphi 0, %s45
      %s34 = sphi 0, %s41
      %s35 = sphi 0, %s33
      %s36 = sphi 0, %s34
      %s37 = sphi 0, %s35
      %s38 = sphi 0, %s36
      %s50 = sphi 0, %s52
      %s53 = sphi 0, %s50
      %s54 = sphi 0, %s53
      %s70 = sphi 0, %s54
      %s76 = sphi 0, %s78
      %s79 = sphi 0, %s76
      %s80 = sphi 0, %s79
      %s96 = sphi 0, %s80
      %s102 = sphi 0, %s104
      %s105 = sphi 0, %s102
      %s106 = sphi 0, %s105
      %s122 = sphi 0, %s106
      %s126 = sphi 0, %s126
      %s128 = sphi 0, %s126
      %s129 = sphi 0, %s128
      %s143 = sphi 0, %s129
      %s147 = sphi 0, %s147
      %s149 = sphi 0, %s147
      %s150 = sphi 0, %s149
      %s164 = sphi 0, %s150
      %s168 = sphi 0, %s168
      %s170 = sphi 0, %s168
      %s171 = sphi 0, %s170
      %s185 = sphi 0, %s171
      %s189 = sphi 0, %s189
      %s191 = sphi 0, %s189
      %s192 = sphi 0, %s191
      %s206 = sphi 0, %s192
      %s210 = sphi 0, %s210
      %s212 = sphi 0, %s210
      %s213 = sphi 0, %s212
      %s227 = sphi 0, %s213
      %s231 = sphi 0, %s231
      %s233 = sphi 0, %s231
      %s234 = sphi 0, %s233
      %s248 = sphi 0, %s234
      %s256 = sphi 0, %s258
      %s259 = sphi 0, %s256
      %s260 = sphi 0, %s259
      %s276 = sphi 0, %s260
    $region4: #{tpu_custom_call.1} parent=1 // loop_header_branch
      %29 = sbr.rel (%p27) target = $region8
    $region5: #{tpu_custom_call.1} parent=1 // loop_body
      %s31 = ssub.s32 %s26, 1
      %s32 = ssub.s32 %s26, 2
      %s39 = sadd.s32 1, %s34
      %p40 = scmp.ge.s32.totalorder %s39, 1
      %s41 = scalar_select %p40, 0, %s39
      %s42 = sadd.s32 1, %s33
      %s43 = scalar_select %p40, %s42, %s33
      %p44 = scmp.ge.s32.totalorder %s43, 2
      %s45 = scalar_select %p44, 0, %s43
      %s46 = ssub.s32 %s33, %s45
      %s47 = ssub.s32 %s34, %s41
      %s48 = sor.u32 %s46, %s47
      %p49 = scmp.eq.s32.totalorder %s48, 0
      %s51 = sadd.s32 %s50, 1
      %s52 = scalar_select %p49, %s50, %s51
      %p55 = pneg %p49
      %p56 = scmp.eq.s32.totalorder %s26, 1
      %p57 = por %p55, %p56
      %p58 = scmp.ne.s32.totalorder %s50, %s53
      %p59 = scmp.eq.s32.totalorder %s26, 0
      %p60 = por %p58, %p59
      %p61 = scmp.ne.s32.totalorder %s50, %s53
      %p62 = scmp.eq.s32.totalorder %s31, 1
      %p63 = por %p61, %p62
      %p64 = scmp.ne.s32.totalorder %s53, %s54
      %p65 = scmp.eq.s32.totalorder %s31, 0
      %p66 = por %p64, %p65
      %p67 = scmp.ne.s32.totalorder %s53, %s54
      %p68 = scmp.eq.s32.totalorder %s32, 1
      %p69 = por %p67, %p68
      %p71 = scmp.ne.s32.totalorder %s54, %s70
      %p72 = scmp.eq.s32.totalorder %s32, 0
      %p73 = por %p71, %p72
      %s74 = ssub.s32 %s33, %s45
      %p75 = scmp.eq.s32.totalorder %s74, 0
      %s77 = sadd.s32 %s76, 1
      %s78 = scalar_select %p75, %s76, %s77
      %p81 = pneg %p75
      %p82 = scmp.eq.s32.totalorder %s26, 1
      %p83 = por %p81, %p82
      %p84 = scmp.ne.s32.totalorder %s76, %s79
      %p85 = scmp.eq.s32.totalorder %s26, 0
      %p86 = por %p84, %p85
      %p87 = scmp.ne.s32.totalorder %s76, %s79
      %p88 = scmp.eq.s32.totalorder %s31, 1
      %p89 = por %p87, %p88
      %p90 = scmp.ne.s32.totalorder %s79, %s80
      %p91 = scmp.eq.s32.totalorder %s31, 0
      %p92 = por %p90, %p91
      %p93 = scmp.ne.s32.totalorder %s79, %s80
      %p94 = scmp.eq.s32.totalorder %s32, 1
      %p95 = por %p93, %p94
      %p97 = scmp.ne.s32.totalorder %s80, %s96
      %p98 = scmp.eq.s32.totalorder %s32, 0
      %p99 = por %p97, %p98
      %s100 = ssub.s32 %s33, %s45
      %p101 = scmp.eq.s32.totalorder %s100, 0
      %s103 = sadd.s32 %s102, 1
      %s104 = scalar_select %p101, %s102, %s103
      %p107 = pneg %p101
      %p108 = scmp.eq.s32.totalorder %s26, 1
      %p109 = por %p107, %p108
      %p110 = scmp.ne.s32.totalorder %s102, %s105
      %p111 = scmp.eq.s32.totalorder %s26, 0
      %p112 = por %p110, %p111
      %p113 = scmp.ne.s32.totalorder %s102, %s105
      %p114 = scmp.eq.s32.totalorder %s31, 1
      %p115 = por %p113, %p114
      %p116 = scmp.ne.s32.totalorder %s105, %s106
      %p117 = scmp.eq.s32.totalorder %s31, 0
      %p118 = por %p116, %p117
      %p119 = scmp.ne.s32.totalorder %s105, %s106
      %p120 = scmp.eq.s32.totalorder %s32, 1
      %p121 = por %p119, %p120
      %p123 = scmp.ne.s32.totalorder %s106, %s122
      %p124 = scmp.eq.s32.totalorder %s32, 0
      %p125 = por %p123, %p124
      %s127 = sadd.s32 %s126, 1
      %p130 = scmp.eq.s32.totalorder %s26, 1
      %p131 = scmp.ne.s32.totalorder %s126, %s128
      %p132 = scmp.eq.s32.totalorder %s26, 0
      %p133 = por %p131, %p132
      %p134 = scmp.ne.s32.totalorder %s126, %s128
      %p135 = scmp.eq.s32.totalorder %s31, 1
      %p136 = por %p134, %p135
      %p137 = scmp.ne.s32.totalorder %s128, %s129
      %p138 = scmp.eq.s32.totalorder %s31, 0
      %p139 = por %p137, %p138
      %p140 = scmp.ne.s32.totalorder %s128, %s129
      %p141 = scmp.eq.s32.totalorder %s32, 1
      %p142 = por %p140, %p141
      %p144 = scmp.ne.s32.totalorder %s129, %s143
      %p145 = scmp.eq.s32.totalorder %s32, 0
      %p146 = por %p144, %p145
      %s148 = sadd.s32 %s147, 1
      %p151 = scmp.eq.s32.totalorder %s26, 1
      %p152 = scmp.ne.s32.totalorder %s147, %s149
      %p153 = scmp.eq.s32.totalorder %s26, 0
      %p154 = por %p152, %p153
      %p155 = scmp.ne.s32.totalorder %s147, %s149
      %p156 = scmp.eq.s32.totalorder %s31, 1
      %p157 = por %p155, %p156
      %p158 = scmp.ne.s32.totalorder %s149, %s150
      %p159 = scmp.eq.s32.totalorder %s31, 0
      %p160 = por %p158, %p159
      %p161 = scmp.ne.s32.totalorder %s149, %s150
      %p162 = scmp.eq.s32.totalorder %s32, 1
      %p163 = por %p161, %p162
      %p165 = scmp.ne.s32.totalorder %s150, %s164
      %p166 = scmp.eq.s32.totalorder %s32, 0
      %p167 = por %p165, %p166
      %s169 = sadd.s32 %s168, 1
      %p172 = scmp.eq.s32.totalorder %s26, 1
      %p173 = scmp.ne.s32.totalorder %s168, %s170
      %p174 = scmp.eq.s32.totalorder %s26, 0
      %p175 = por %p173, %p174
      %p176 = scmp.ne.s32.totalorder %s168, %s170
      %p177 = scmp.eq.s32.totalorder %s31, 1
      %p178 = por %p176, %p177
      %p179 = scmp.ne.s32.totalorder %s170, %s171
      %p180 = scmp.eq.s32.totalorder %s31, 0
      %p181 = por %p179, %p180
      %p182 = scmp.ne.s32.totalorder %s170, %s171
      %p183 = scmp.eq.s32.totalorder %s32, 1
      %p184 = por %p182, %p183
      %p186 = scmp.ne.s32.totalorder %s171, %s185
      %p187 = scmp.eq.s32.totalorder %s32, 0
      %p188 = por %p186, %p187
      %s190 = sadd.s32 %s189, 1
      %p193 = scmp.eq.s32.totalorder %s26, 1
      %p194 = scmp.ne.s32.totalorder %s189, %s191
      %p195 = scmp.eq.s32.totalorder %s26, 0
      %p196 = por %p194, %p195
      %p197 = scmp.ne.s32.totalorder %s189, %s191
      %p198 = scmp.eq.s32.totalorder %s31, 1
      %p199 = por %p197, %p198
      %p200 = scmp.ne.s32.totalorder %s191, %s192
      %p201 = scmp.eq.s32.totalorder %s31, 0
      %p202 = por %p200, %p201
      %p203 = scmp.ne.s32.totalorder %s191, %s192
      %p204 = scmp.eq.s32.totalorder %s32, 1
      %p205 = por %p203, %p204
      %p207 = scmp.ne.s32.totalorder %s192, %s206
      %p208 = scmp.eq.s32.totalorder %s32, 0
      %p209 = por %p207, %p208
      %s211 = sadd.s32 %s210, 1
      %p214 = scmp.eq.s32.totalorder %s26, 1
      %p215 = scmp.ne.s32.totalorder %s210, %s212
      %p216 = scmp.eq.s32.totalorder %s26, 0
      %p217 = por %p215, %p216
      %p218 = scmp.ne.s32.totalorder %s210, %s212
      %p219 = scmp.eq.s32.totalorder %s31, 1
      %p220 = por %p218, %p219
      %p221 = scmp.ne.s32.totalorder %s212, %s213
      %p222 = scmp.eq.s32.totalorder %s31, 0
      %p223 = por %p221, %p222
      %p224 = scmp.ne.s32.totalorder %s212, %s213
      %p225 = scmp.eq.s32.totalorder %s32, 1
      %p226 = por %p224, %p225
      %p228 = scmp.ne.s32.totalorder %s213, %s227
      %p229 = scmp.eq.s32.totalorder %s32, 0
      %p230 = por %p228, %p229
      %s232 = sadd.s32 %s231, 1
      %p235 = scmp.eq.s32.totalorder %s26, 1
      %p236 = scmp.ne.s32.totalorder %s231, %s233
      %p237 = scmp.eq.s32.totalorder %s26, 0
      %p238 = por %p236, %p237
      %p239 = scmp.ne.s32.totalorder %s231, %s233
      %p240 = scmp.eq.s32.totalorder %s31, 1
      %p241 = por %p239, %p240
      %p242 = scmp.ne.s32.totalorder %s233, %s234
      %p243 = scmp.eq.s32.totalorder %s31, 0
      %p244 = por %p242, %p243
      %p245 = scmp.ne.s32.totalorder %s233, %s234
      %p246 = scmp.eq.s32.totalorder %s32, 1
      %p247 = por %p245, %p246
      %p249 = scmp.ne.s32.totalorder %s234, %s248
      %p250 = scmp.eq.s32.totalorder %s32, 0
      %p251 = por %p249, %p250
      %s252 = ssub.s32 %s33, %s45
      %s253 = ssub.s32 %s34, %s41
      %s254 = sor.u32 %s252, %s253
      %p255 = scmp.eq.s32.totalorder %s254, 0
      %s257 = sadd.s32 %s256, 1
      %s258 = scalar_select %p255, %s256, %s257
      %p261 = pneg %p255
      %p262 = scmp.eq.s32.totalorder %s26, 1
      %p263 = por %p261, %p262
      %p264 = scmp.ne.s32.totalorder %s256, %s259
      %p265 = scmp.eq.s32.totalorder %s26, 0
      %p266 = por %p264, %p265
      %p267 = scmp.ne.s32.totalorder %s256, %s259
      %p268 = scmp.eq.s32.totalorder %s31, 1
      %p269 = por %p267, %p268
      %p270 = scmp.ne.s32.totalorder %s259, %s260
      %p271 = scmp.eq.s32.totalorder %s31, 0
      %p272 = por %p270, %p271
      %p273 = scmp.ne.s32.totalorder %s259, %s260
      %p274 = scmp.eq.s32.totalorder %s32, 1
      %p275 = por %p273, %p274
      %p277 = scmp.ne.s32.totalorder %s260, %s276
      %p278 = scmp.eq.s32.totalorder %s32, 0
      %p279 = por %p277, %p278
      %p280 = scmp.le.s32.totalorder 1, %s26
      %p281 = scmp.lt.s32.totalorder %s26, 3
      %p282 = pnand %p280, %p281
      %p283 = pneg %p282
      // Predicated region
      $region9: #{tpu_custom_call.1} parent=5 // pred_check
        _
      $region10: #{tpu_custom_call.1} parent=5 // pred_check_branch
        %285 = sbr.rel (%p282) target = $region12
      $region11: #{tpu_custom_call.1} parent=5 // pred_region
        %s286 = ssub.s32 %s26, 1
        // Predicated region
        $region13: #{tpu_custom_call.1} parent=11 // pred_check
          %p287 = pneg %p139
        $region14: #{tpu_custom_call.1} parent=11 // pred_check_branch
          %289 = sbr.rel (%p287) target = $region16
        $region15: #{tpu_custom_call.1} parent=11 // pred_region
          %291 = vsyncadd [#allocation11], 0
          %s292 = sshll.u32 %s3, 4
          %s293 = int_to_ptr.hbm [resolvable:$true] %s292
          %s294 = sshll.u32 [#allocation10], 4
          %s295 = int_to_ptr.vmem [resolvable:$true] %s294
          %300 = dma.hbm_to_vmem [thread:$0]  %s293, 1024, %s295, [#allocation11], 64, 64, 4
        $region16: #{tpu_custom_call.1} parent=11 // pred_fallthru
          _
        // Predicated region
        $region17: #{tpu_custom_call.1} parent=11 // pred_check
          %p301 = pneg %p160
        $region18: #{tpu_custom_call.1} parent=11 // pred_check_branch
          %303 = sbr.rel (%p301) target = $region20
        $region19: #{tpu_custom_call.1} parent=11 // pred_region
          _
        $region20: #{tpu_custom_call.1} parent=11 // pred_fallthru
          _
        // Predicated region
        $region21: #{tpu_custom_call.1} parent=11 // pred_check
          %p304 = pneg %p181
        $region22: #{tpu_custom_call.1} parent=11 // pred_check_branch
          %306 = sbr.rel (%p304) target = $region24
        $region23: #{tpu_custom_call.1} parent=11 // pred_region
          %308 = vsyncadd [#allocation11], 0
          %s309 = sshll.u32 %s5, 4
          %s310 = int_to_ptr.hbm [resolvable:$true] %s309
          %s311 = sshll.u32 [#allocation12], 4
          %s312 = int_to_ptr.vmem [resolvable:$true] %s311
          %317 = dma.hbm_to_vmem [thread:$0]  %s310, 1024, %s312, [#allocation11], 64, 64, 4
        $region24: #{tpu_custom_call.1} parent=11 // pred_fallthru
          _
        // Predicated region
        $region25: #{tpu_custom_call.1} parent=11 // pred_check
          %p318 = pneg %p202
        $region26: #{tpu_custom_call.1} parent=11 // pred_check_branch
          %320 = sbr.rel (%p318) target = $region28
        $region27: #{tpu_custom_call.1} parent=11 // pred_region
          _
        $region28: #{tpu_custom_call.1} parent=11 // pred_fallthru
          _
        // Predicated region
        $region29: #{tpu_custom_call.1} parent=11 // pred_check
          %p321 = pneg %p223
        $region30: #{tpu_custom_call.1} parent=11 // pred_check_branch
          %323 = sbr.rel (%p321) target = $region32
        $region31: #{tpu_custom_call.1} parent=11 // pred_region
          %325 = vsyncadd [#allocation14], 0
          %s326 = sshll.u32 %s7, 4
          %s327 = int_to_ptr.hbm [resolvable:$true] %s326
          %s328 = sshll.u32 [#allocation13], 4
          %s329 = int_to_ptr.vmem [resolvable:$true] %s328
          %334 = dma.hbm_to_vmem [thread:$0]  %s327, 1024, %s329, [#allocation14], 64, 64, 4
        $region32: #{tpu_custom_call.1} parent=11 // pred_fallthru
          _
        // Predicated region
        $region33: #{tpu_custom_call.1} parent=11 // pred_check
          %p335 = pneg %p244
        $region34: #{tpu_custom_call.1} parent=11 // pred_check_branch
          %337 = sbr.rel (%p335) target = $region36
        $region35: #{tpu_custom_call.1} parent=11 // pred_region
          _
        $region36: #{tpu_custom_call.1} parent=11 // pred_fallthru
          _
      $region12: #{tpu_custom_call.1} parent=5 // pred_fallthru
        _
      %p338 = scmp.lt.s32.totalorder %s26, 2
      // Predicated region
      $region37: #{tpu_custom_call.1} parent=5 // pred_check
        %p339 = pneg %p338
      $region38: #{tpu_custom_call.1} parent=5 // pred_check_branch
        %341 = sbr.rel (%p339) target = $region40
      $region39: #{tpu_custom_call.1} parent=5 // pred_region
        // Predicated region
        $region41: #{tpu_custom_call.1} parent=39 // pred_check
          %p342 = pneg %p60
        $region42: #{tpu_custom_call.1} parent=39 // pred_check_branch
          %344 = sbr.rel (%p342) target = $region44
        $region43: #{tpu_custom_call.1} parent=39 // pred_region
          %s345 = sand.u32 %s50, 1
          %s346 = scalar_lea.sflag [#allocation5], %s345
          %s347 = sand.u32 %s50, 1
          %s348 = smul.addr %s347, 4
          %s349 = scalar_lea.vmem [#allocation4], %s348
          %351 = vsyncadd %s346, 0
          %s352 = sadd.s32 %s34, %s33
          %s353 = smul.addr %s352, 4
          %s354 = scalar_lea.hbm %s0, %s353
          %s356 = sshll.u32 %s354, 4
          %s357 = int_to_ptr.hbm [resolvable:$true] %s356
          %s358 = sshll.u32 %s349, 4
          %s359 = int_to_ptr.vmem [resolvable:$true] %s358
          %361 = dma.hbm_to_vmem [thread:$0]  %s357, 64, %s359, %s346
        $region44: #{tpu_custom_call.1} parent=39 // pred_fallthru
          _
        // Predicated region
        $region45: #{tpu_custom_call.1} parent=39 // pred_check
          %p362 = pneg %p86
        $region46: #{tpu_custom_call.1} parent=39 // pred_check_branch
          %364 = sbr.rel (%p362) target = $region48
        $region47: #{tpu_custom_call.1} parent=39 // pred_region
          %s365 = sand.u32 %s26, 1
          %s366 = scalar_lea.sflag [#allocation8], %s365
          %s367 = sand.u32 %s76, 1
          %s368 = smul.addr %s367, 4
          %s369 = scalar_lea.vmem [#allocation7], %s368
          %371 = vsyncadd %s366, 0
          %s372 = smul.addr %s33, 4
          %s373 = scalar_lea.hbm %s1, %s372
          %s375 = sshll.u32 %s373, 4
          %s376 = int_to_ptr.hbm [resolvable:$true] %s375
          %s377 = sshll.u32 %s369, 4
          %s378 = int_to_ptr.vmem [resolvable:$true] %s377
          %380 = dma.hbm_to_vmem [thread:$0]  %s376, 64, %s378, %s366
        $region48: #{tpu_custom_call.1} parent=39 // pred_fallthru
          _
        // Predicated region
        $region49: #{tpu_custom_call.1} parent=39 // pred_check
          %p381 = pneg %p112
        $region50: #{tpu_custom_call.1} parent=39 // pred_check_branch
          %383 = sbr.rel (%p381) target = $region52
        $region51: #{tpu_custom_call.1} parent=39 // pred_region
          %s384 = sand.u32 %s26, 1
          %s385 = scalar_lea.sflag [#allocation8], %s384
          %s386 = sand.u32 %s102, 1
          %s387 = smul.addr %s386, 4
          %s388 = scalar_lea.vmem [#allocation9], %s387
          %390 = vsyncadd %s385, 0
          %s391 = smul.addr %s33, 4
          %s392 = scalar_lea.hbm %s2, %s391
          %s394 = sshll.u32 %s392, 4
          %s395 = int_to_ptr.hbm [resolvable:$true] %s394
          %s396 = sshll.u32 %s388, 4
          %s397 = int_to_ptr.vmem [resolvable:$true] %s396
          %399 = dma.hbm_to_vmem [thread:$0]  %s395, 64, %s397, %s385
        $region52: #{tpu_custom_call.1} parent=39 // pred_fallthru
          _
      $region40: #{tpu_custom_call.1} parent=5 // pred_fallthru
        _
      %p400 = scmp.le.s32.totalorder 1, %s26
      %p401 = scmp.lt.s32.totalorder %s26, 3
      %p402 = pnand %p400, %p401
      %p403 = pneg %p402
      // Predicated region
      $region53: #{tpu_custom_call.1} parent=5 // pred_check
        _
      $region54: #{tpu_custom_call.1} parent=5 // pred_check_branch
        %405 = sbr.rel (%p402) target = $region56
      $region55: #{tpu_custom_call.1} parent=5 // pred_region
        %s406 = ssub.s32 %s26, 1
        %s407 = sand.u32 %s53, 1
        %s408 = scalar_lea.sflag [#allocation5], %s407
        %s409 = sand.u32 %s53, 1
        %s410 = smul.addr %s409, 4
        %s411 = scalar_lea.vmem [#allocation4], %s410
        // Predicated region
        $region57: #{tpu_custom_call.1} parent=55 // pred_check
          %p412 = pneg %p66
        $region58: #{tpu_custom_call.1} parent=55 // pred_check_branch
          %414 = sbr.rel (%p412) target = $region60
        $region59: #{tpu_custom_call.1} parent=55 // pred_region
          %416 = dma.done %s408, 64
        $region60: #{tpu_custom_call.1} parent=55 // pred_fallthru
          _
        %s417 = sand.u32 %s31, 1
        %s418 = scalar_lea.sflag [#allocation8], %s417
        %s419 = sand.u32 %s79, 1
        %s420 = smul.addr %s419, 4
        %s421 = scalar_lea.vmem [#allocation7], %s420
        // Predicated region
        $region61: #{tpu_custom_call.1} parent=55 // pred_check
          %p422 = pneg %p92
        $region62: #{tpu_custom_call.1} parent=55 // pred_check_branch
          %424 = sbr.rel (%p422) target = $region64
        $region63: #{tpu_custom_call.1} parent=55 // pred_region
          %426 = dma.done %s418, 64
        $region64: #{tpu_custom_call.1} parent=55 // pred_fallthru
          _
        %s427 = sand.u32 %s31, 1
        %s428 = scalar_lea.sflag [#allocation8], %s427
        %s429 = sand.u32 %s105, 1
        %s430 = smul.addr %s429, 4
        %s431 = scalar_lea.vmem [#allocation9], %s430
        // Predicated region
        $region65: #{tpu_custom_call.1} parent=55 // pred_check
          %p432 = pneg %p118
        $region66: #{tpu_custom_call.1} parent=55 // pred_check_branch
          %434 = sbr.rel (%p432) target = $region68
        $region67: #{tpu_custom_call.1} parent=55 // pred_region
          %436 = dma.done %s428, 64
        $region68: #{tpu_custom_call.1} parent=55 // pred_fallthru
          _
        // Predicated region
        $region69: #{tpu_custom_call.1} parent=55 // pred_check
          %p437 = pneg %p139
        $region70: #{tpu_custom_call.1} parent=55 // pred_check_branch
          %439 = sbr.rel (%p437) target = $region72
        $region71: #{tpu_custom_call.1} parent=55 // pred_region
          %441 = dma.done [#allocation11], 1024
        $region72: #{tpu_custom_call.1} parent=55 // pred_fallthru
          _
        // Predicated region
        $region73: #{tpu_custom_call.1} parent=55 // pred_check
          %p442 = pneg %p181
        $region74: #{tpu_custom_call.1} parent=55 // pred_check_branch
          %444 = sbr.rel (%p442) target = $region76
        $region75: #{tpu_custom_call.1} parent=55 // pred_region
          %446 = dma.done [#allocation11], 1024
        $region76: #{tpu_custom_call.1} parent=55 // pred_fallthru
          _
        // Predicated region
        $region77: #{tpu_custom_call.1} parent=55 // pred_check
          %p447 = pneg %p223
        $region78: #{tpu_custom_call.1} parent=55 // pred_check_branch
          %449 = sbr.rel (%p447) target = $region80
        $region79: #{tpu_custom_call.1} parent=55 // pred_region
          %451 = dma.done [#allocation14], 1024
        $region80: #{tpu_custom_call.1} parent=55 // pred_fallthru
          _
        %s452 = sand.u32 %s53, 1
        %s453 = scalar_lea.sflag [#allocation5], %s452
        %s454 = sand.u32 %s53, 1
        %s455 = smul.addr %s454, 4
        %s456 = scalar_lea.vmem [#allocation4], %s455
        %p457 = pneg %p66
        %p458 = pneg %p63
        %s459 = sand.u32 %s31, 1
        %s460 = scalar_lea.sflag [#allocation8], %s459
        %s461 = sand.u32 %s79, 1
        %s462 = smul.addr %s461, 4
        %s463 = scalar_lea.vmem [#allocation7], %s462
        %p464 = pneg %p92
        %p465 = pneg %p89
        %s466 = sand.u32 %s31, 1
        %s467 = scalar_lea.sflag [#allocation8], %s466
        %s468 = sand.u32 %s105, 1
        %s469 = smul.addr %s468, 4
        %s470 = scalar_lea.vmem [#allocation9], %s469
        %p471 = pneg %p118
        %p472 = pneg %p115
        %p473 = pneg %p139
        %p474 = pneg %p136
        %p475 = pneg %p160
        %p476 = pneg %p157
        %p477 = pneg %p181
        %p478 = pneg %p178
        %p479 = pneg %p202
        %p480 = pneg %p199
        %p481 = pneg %p223
        %p482 = pneg %p220
        %p483 = pneg %p244
        %p484 = pneg %p241
        %p485 = pneg %p272
        %p486 = pneg %p269
        %s487 = sand.u32 %s259, 1
        %s488 = scalar_lea.sflag [#allocation6], %s487
        %s489 = sand.u32 %s259, 1
        %s490 = smul.addr %s489, 4
        %s491 = scalar_lea.vmem [#allocation15], %s490
        %p493 = scmp.eq.s32.totalorder %s36, 0
        // Predicated region
        $region81: #{tpu_custom_call.1} parent=55 // pred_check
          %p494 = pneg %p493
        $region82: #{tpu_custom_call.1} parent=55 // pred_check_branch
          %496 = sbr.rel (%p494) target = $region84
        $region83: #{tpu_custom_call.1} parent=55 // pred_region
          %v497 = vld [vmem:[%s421] sm:$0xf]
          %v498 = vld [vmem:[#allocation12] sm:$0xf]
          %v499 = vld [vmem:[#allocation12 + $0x4] sm:$0xf]
          %v500 = vld [vmem:[#allocation12 + $0x8] sm:$0xf]
          %v501 = vld [vmem:[#allocation12 + $0xc] sm:$0xf]
          %v502 = vld [vmem:[#allocation12 + $0x10] sm:$0xf]
          %v503 = vld [vmem:[#allocation12 + $0x14] sm:$0xf]
          %v504 = vld [vmem:[#allocation12 + $0x18] sm:$0xf]
          %v505 = vld [vmem:[#allocation12 + $0x1c] sm:$0xf]
          %v506 = vld [vmem:[#allocation12 + $0x20] sm:$0xf]
          %v507 = vld [vmem:[#allocation12 + $0x24] sm:$0xf]
          %v508 = vld [vmem:[#allocation12 + $0x28] sm:$0xf]
          %v509 = vld [vmem:[#allocation12 + $0x2c] sm:$0xf]
          %v510 = vld [vmem:[#allocation12 + $0x30] sm:$0xf]
          %v511 = vld [vmem:[#allocation12 + $0x34] sm:$0xf]
          %v512 = vld [vmem:[#allocation12 + $0x38] sm:$0xf]
          %v513 = vld [vmem:[#allocation12 + $0x3c] sm:$0xf]
          %v514 = vld [vmem:[%s6] sm:$0x1]
          %v516 = vperm.slane %v514, 0
          %v534 = vunpack.c.l.b16 %v498
          %v535 = vunpack.c.l.b16 %v499
          %v536 = vunpack.c.l.b16 %v500
          %v537 = vunpack.c.l.b16 %v501
          %v538 = vunpack.c.l.b16 %v502
          %v539 = vunpack.c.l.b16 %v503
          %v540 = vunpack.c.l.b16 %v504
          %v541 = vunpack.c.l.b16 %v505
          %v542 = vunpack.c.l.b16 %v506
          %v543 = vunpack.c.l.b16 %v507
          %v544 = vunpack.c.l.b16 %v508
          %v545 = vunpack.c.l.b16 %v509
          %v546 = vunpack.c.l.b16 %v510
          %v547 = vunpack.c.l.b16 %v511
          %v548 = vunpack.c.l.b16 %v512
          %v549 = vunpack.c.l.b16 %v513
          %v550 = vpack.c.b16 %v535, %v534
          %v551 = vpack.c.b16 %v537, %v536
          %v552 = vpack.c.b16 %v539, %v538
          %v553 = vpack.c.b16 %v541, %v540
          %v554 = vpack.c.b16 %v543, %v542
          %v555 = vpack.c.b16 %v545, %v544
          %v556 = vpack.c.b16 %v547, %v546
          %v557 = vpack.c.b16 %v549, %v548
          %566 = vmatpush.bf16.msra.mxu0 %v557
          %567 = vmatpush.bf16.msra.mxu0 %v556
          %568 = vmatpush.bf16.msra.mxu0 %v555
          %569 = vmatpush.bf16.msra.mxu0 %v554
          %570 = vmatpush.bf16.msra.mxu0 %v553
          %571 = vmatpush.bf16.msra.mxu0 %v552
          %572 = vmatpush.bf16.msra.mxu0 %v551
          %573 = vmatpush.bf16.msra.mxu0 %v550
          %574 = vmatmul.bf16.gmra.mxu0 %v497
          %v575 = vpop.f32.mrf.mxu0
          %v576 = vadd.f32 %v516, %v575
          %v577 = vpop.f32.mrf.mxu0
          %578 = vdwg.mxu0
          %v579 = vld [vmem:[%s431] sm:$0xf]
          %v580 = vld [vmem:[#allocation13] sm:$0xf]
          %v581 = vld [vmem:[#allocation13 + $0x4] sm:$0xf]
          %v582 = vld [vmem:[#allocation13 + $0x8] sm:$0xf]
          %v583 = vld [vmem:[#allocation13 + $0xc] sm:$0xf]
          %v584 = vld [vmem:[#allocation13 + $0x10] sm:$0xf]
          %v585 = vld [vmem:[#allocation13 + $0x14] sm:$0xf]
          %v586 = vld [vmem:[#allocation13 + $0x18] sm:$0xf]
          %v587 = vld [vmem:[#allocation13 + $0x1c] sm:$0xf]
          %v588 = vld [vmem:[#allocation13 + $0x20] sm:$0xf]
          %v589 = vld [vmem:[#allocation13 + $0x24] sm:$0xf]
          %v590 = vld [vmem:[#allocation13 + $0x28] sm:$0xf]
          %v591 = vld [vmem:[#allocation13 + $0x2c] sm:$0xf]
          %v592 = vld [vmem:[#allocation13 + $0x30] sm:$0xf]
          %v593 = vld [vmem:[#allocation13 + $0x34] sm:$0xf]
          %v594 = vld [vmem:[#allocation13 + $0x38] sm:$0xf]
          %v595 = vld [vmem:[#allocation13 + $0x3c] sm:$0xf]
          %v596 = vld [vmem:[%s8] sm:$0x1]
          %v598 = vperm.slane %v596, 0
          %v616 = vunpack.c.l.b16 %v580
          %v617 = vunpack.c.l.b16 %v581
          %v618 = vunpack.c.l.b16 %v582
          %v619 = vunpack.c.l.b16 %v583
          %v620 = vunpack.c.l.b16 %v584
          %v621 = vunpack.c.l.b16 %v585
          %v622 = vunpack.c.l.b16 %v586
          %v623 = vunpack.c.l.b16 %v587
          %v624 = vunpack.c.l.b16 %v588
          %v625 = vunpack.c.l.b16 %v589
          %v626 = vunpack.c.l.b16 %v590
          %v627 = vunpack.c.l.b16 %v591
          %v628 = vunpack.c.l.b16 %v592
          %v629 = vunpack.c.l.b16 %v593
          %v630 = vunpack.c.l.b16 %v594
          %v631 = vunpack.c.l.b16 %v595
          %v632 = vpack.c.b16 %v617, %v616
          %v633 = vpack.c.b16 %v619, %v618
          %v634 = vpack.c.b16 %v621, %v620
          %v635 = vpack.c.b16 %v623, %v622
          %v636 = vpack.c.b16 %v625, %v624
          %v637 = vpack.c.b16 %v627, %v626
          %v638 = vpack.c.b16 %v629, %v628
          %v639 = vpack.c.b16 %v631, %v630
          %648 = vmatpush.bf16.msra.mxu0 %v639
          %649 = vmatpush.bf16.msra.mxu0 %v638
          %650 = vmatpush.bf16.msra.mxu0 %v637
          %651 = vmatpush.bf16.msra.mxu0 %v636
          %652 = vmatpush.bf16.msra.mxu0 %v635
          %653 = vmatpush.bf16.msra.mxu0 %v634
          %654 = vmatpush.bf16.msra.mxu0 %v633
          %655 = vmatpush.bf16.msra.mxu0 %v632
          %656 = vmatmul.bf16.gmra.mxu0 %v579
          %v657 = vpop.f32.mrf.mxu0
          %v658 = vadd.f32 %v598, %v657
          %v659 = vpop.f32.mrf.mxu0
          %660 = vdwg.mxu0
          %v661 = vpack.c.bf16 %v576, %v576
          %662 = vst [vmem:[#allocation2] sm:$0xf] %v661
          %v663 = vpack.c.bf16 %v658, %v658
          %664 = vst [vmem:[#allocation3] sm:$0xf] %v663
        $region84: #{tpu_custom_call.1} parent=55 // pred_fallthru
          _
        %v665 = vld [vmem:[%s411] sm:$0xf]
        %v666 = vld [vmem:[#allocation10] sm:$0xf]
        %v667 = vld [vmem:[#allocation10 + $0x4] sm:$0xf]
        %v668 = vld [vmem:[#allocation10 + $0x8] sm:$0xf]
        %v669 = vld [vmem:[#allocation10 + $0xc] sm:$0xf]
        %v670 = vld [vmem:[#allocation10 + $0x10] sm:$0xf]
        %v671 = vld [vmem:[#allocation10 + $0x14] sm:$0xf]
        %v672 = vld [vmem:[#allocation10 + $0x18] sm:$0xf]
        %v673 = vld [vmem:[#allocation10 + $0x1c] sm:$0xf]
        %v674 = vld [vmem:[#allocation10 + $0x20] sm:$0xf]
        %v675 = vld [vmem:[#allocation10 + $0x24] sm:$0xf]
        %v676 = vld [vmem:[#allocation10 + $0x28] sm:$0xf]
        %v677 = vld [vmem:[#allocation10 + $0x2c] sm:$0xf]
        %v678 = vld [vmem:[#allocation10 + $0x30] sm:$0xf]
        %v679 = vld [vmem:[#allocation10 + $0x34] sm:$0xf]
        %v680 = vld [vmem:[#allocation10 + $0x38] sm:$0xf]
        %v681 = vld [vmem:[#allocation10 + $0x3c] sm:$0xf]
        %v682 = vld [vmem:[%s4] sm:$0x1]
        %v684 = vperm.slane %v682, 0
        %v702 = vunpack.c.l.b16 %v666
        %v703 = vunpack.c.l.b16 %v667
        %v704 = vunpack.c.l.b16 %v668
        %v705 = vunpack.c.l.b16 %v669
        %v706 = vunpack.c.l.b16 %v670
        %v707 = vunpack.c.l.b16 %v671
        %v708 = vunpack.c.l.b16 %v672
        %v709 = vunpack.c.l.b16 %v673
        %v710 = vunpack.c.l.b16 %v674
        %v711 = vunpack.c.l.b16 %v675
        %v712 = vunpack.c.l.b16 %v676
        %v713 = vunpack.c.l.b16 %v677
        %v714 = vunpack.c.l.b16 %v678
        %v715 = vunpack.c.l.b16 %v679
        %v716 = vunpack.c.l.b16 %v680
        %v717 = vunpack.c.l.b16 %v681
        %v718 = vpack.c.b16 %v703, %v702
        %v719 = vpack.c.b16 %v705, %v704
        %v720 = vpack.c.b16 %v707, %v706
        %v721 = vpack.c.b16 %v709, %v708
        %v722 = vpack.c.b16 %v711, %v710
        %v723 = vpack.c.b16 %v713, %v712
        %v724 = vpack.c.b16 %v715, %v714
        %v725 = vpack.c.b16 %v717, %v716
        %734 = vmatpush.bf16.msra.mxu0 %v725
        %735 = vmatpush.bf16.msra.mxu0 %v724
        %736 = vmatpush.bf16.msra.mxu0 %v723
        %737 = vmatpush.bf16.msra.mxu0 %v722
        %738 = vmatpush.bf16.msra.mxu0 %v721
        %739 = vmatpush.bf16.msra.mxu0 %v720
        %740 = vmatpush.bf16.msra.mxu0 %v719
        %741 = vmatpush.bf16.msra.mxu0 %v718
        %742 = vmatmul.bf16.gmra.mxu0 %v665
        %v743 = vpop.f32.mrf.mxu0
        %v744 = vadd.f32 %v684, %v743
        %v745 = vpop.f32.mrf.mxu0
        %746 = vdwg.mxu0
        %v747 = vpack.c.bf16 %v744, %v744
        %v748 = vld [vmem:[#allocation2] sm:$0xf]
        %749 = vmatpush.bf16.xpose.msra.mxu0 0
        %750 = vmatpush.bf16.xpose.msra.mxu0 0
        %751 = vmatpush.bf16.xpose.msra.mxu0 0
        %752 = vmatpush.bf16.xpose.msra.mxu0 0
        %753 = vmatpush.bf16.xpose.msra.mxu0 0
        %754 = vmatpush.bf16.xpose.msra.mxu0 0
        %755 = vmatpush.bf16.xpose.msra.mxu0 0
        %756 = vmatpush.bf16.xpose.msra.mxu0 %v748
        %757 = vmatmul.bf16.gmra.mxu0 %v747
        %v758 = vpop.f32.mrf.mxu0
        %v759 = vadd.f32 0.0, %v758
        %v760 = vpop.f32.mrf.mxu0
        %761 = vdwg.mxu0
        %vm762 = vcmask 64512
        %v763 = vsel %vm762, %v759, -inf
        %764 = vmax.xlane.f32.xlu0 %v763
        %v765 = vpop.xlane.xlu0 %764
        %v766 = vsub.f32 %v759, %v765
        %v767 = vmul.f32 %v766, 1.442695
        %v768 = vpow.pop %v767
        %v769 = vsel %vm762, %v768, 0.0
        %770 = vadd.xlane.f32.xlu0 %v769
        %v771 = vpop.xlane.xlu0 %770
        %v772 = vpack.c.bf16 %v768, %v768
        %v773 = vld [vmem:[#allocation3] sm:$0xf]
        %v775 = vsel %vm762, %v772, 0
        %vm777 = vcmask 1043456
        %v779 = vsel %vm777, %v773, 0
        %781 = vmatpush.bf16.msra.mxu0 0
        %782 = vmatpush.bf16.msra.mxu0 0
        %783 = vmatpush.bf16.msra.mxu0 0
        %784 = vmatpush.bf16.msra.mxu0 0
        %785 = vmatpush.bf16.msra.mxu0 0
        %786 = vmatpush.bf16.msra.mxu0 0
        %787 = vmatpush.bf16.msra.mxu0 0
        %788 = vmatpush.bf16.msra.mxu0 %v779
        %789 = vmatmul.bf16.gmra.mxu0 %v775
        %v790 = vpop.f32.mrf.mxu0
        %v791 = vadd.f32 0.0, %v790
        %v792 = vpop.f32.mrf.mxu0
        %793 = vdwg.mxu0
        %v794 = vrcp.pop %v771
        %v795 = vmul.f32 %v791, %v794
        %v796 = vpack.c.bf16 %v795, %v795
        %797 = vst [vmem:[%s491] sm:$0xf] %v796
        %s798 = sand.u32 %s259, 1
        %s799 = scalar_lea.sflag [#allocation6], %s798
        %s800 = sand.u32 %s259, 1
        %s801 = smul.addr %s800, 4
        %s802 = scalar_lea.vmem [#allocation15], %s801
        // Predicated region
        $region85: #{tpu_custom_call.1} parent=55 // pred_check
          %p803 = pneg %p269
        $region86: #{tpu_custom_call.1} parent=55 // pred_check_branch
          %805 = sbr.rel (%p803) target = $region88
        $region87: #{tpu_custom_call.1} parent=55 // pred_region
          %807 = vsyncadd %s799, 0
          %s808 = sadd.s32 %s36, %s35
          %s809 = smul.addr %s808, 4
          %s810 = scalar_lea.hbm %s9, %s809
          %s812 = sshll.u32 %s802, 4
          %s813 = int_to_ptr.vmem [resolvable:$true] %s812
          %s814 = sshll.u32 %s810, 4
          %s815 = int_to_ptr.hbm [resolvable:$true] %s814
          %817 = dma.vmem_to_hbm [thread:$0]  %s813, 64, %s815, %s799
        $region88: #{tpu_custom_call.1} parent=55 // pred_fallthru
          _
      $region56: #{tpu_custom_call.1} parent=5 // pred_fallthru
        _
      %p818 = scmp.le.s32.totalorder 2, %s26
      // Predicated region
      $region89: #{tpu_custom_call.1} parent=5 // pred_check
        %p819 = pneg %p818
      $region90: #{tpu_custom_call.1} parent=5 // pred_check_branch
        %821 = sbr.rel (%p819) target = $region92
      $region91: #{tpu_custom_call.1} parent=5 // pred_region
        %s822 = ssub.s32 %s26, 2
        // Predicated region
        $region93: #{tpu_custom_call.1} parent=91 // pred_check
          %p823 = pneg %p275
        $region94: #{tpu_custom_call.1} parent=91 // pred_check_branch
          %825 = sbr.rel (%p823) target = $region96
        $region95: #{tpu_custom_call.1} parent=91 // pred_region
          %s826 = sand.u32 %s260, 1
          %s827 = scalar_lea.sflag [#allocation6], %s826
          %s828 = sand.u32 %s260, 1
          %s829 = smul.addr %s828, 4
          %s830 = scalar_lea.vmem [#allocation15], %s829
          %832 = dma.done %s827, 64
        $region96: #{tpu_custom_call.1} parent=91 // pred_fallthru
          _
      $region92: #{tpu_custom_call.1} parent=5 // pred_fallthru
        _
    $region6: #{tpu_custom_call.1} parent=1 // loop_footer
      %s30 = sadd.s32 1, %s26
    $region7: #{tpu_custom_call.1} parent=1 // loop_footer_branch
      %25 = sbr.rel target = $region3
    $region8: #{tpu_custom_call.1} parent=1 // loop_exit
      _
    %833 = vsyncpa [#allocation5], 1
    %s834 = scalar_lea.sflag [#allocation5], 1
    %835 = vsyncpa %s834, 1
    %836 = vsyncpa [#allocation8], 1
    %s837 = scalar_lea.sflag [#allocation8], 1
    %838 = vsyncpa %s837, 1
    %839 = vsyncpa [#allocation11], 1
    %840 = vsyncpa [#allocation14], 1
    %841 = vsyncpa [#allocation6], 1
    %s842 = scalar_lea.sflag [#allocation6], 1
    %843 = vsyncpa %s842, 1

</llo_original>
